<compile_context>
chip_gen: v5e
topology: v5e:2x2
jax: 0.10.0
libtpu: 0.0.40
codegen_flags: <defaults>
</compile_context>

<pallas_src>
import functools

import jax
import jax.numpy as jnp
from jax.experimental import pallas as pl
from jax.experimental.pallas import tpu as pltpu


def _round_up(x, m):
    return ((x + m - 1) // m) * m


def _vmem_gather_kernel(ids_ref, table_ref, out_ref, *, tb):
    """out[t, :] = table[ids[base + t], :] with the table VMEM-resident."""
    base = pl.program_id(0) * tb

    def copy_row(t, carry):
        idx = ids_ref[base + t]                       # scalar read from SMEM
        out_ref[pl.ds(t, 1), :] = table_ref[pl.ds(idx, 1), :]
        return carry

    jax.lax.fori_loop(0, tb, copy_row, 0, unroll=8)


def _hbm_gather_kernel(ids_ref, table_hbm_ref, out_ref, copy_sems, *, tb, nsem):
    """out[t, :] = table[ids[base + t], :] with the table left in HBM.

    Per-row async DMAs straight into the pipelined output block, with a ring
    of `nsem` semaphores keeping up to `nsem` row DMAs in flight to hide HBM
    latency of the small (E * 4-byte) row transfers.
    """
    base = pl.program_id(0) * tb

    def row_copy(t, slot):
        idx = ids_ref[base + t]                       # scalar read from SMEM
        return pltpu.make_async_copy(
            table_hbm_ref.at[idx], out_ref.at[t], copy_sems.at[slot])

    # Prime the ring.
    for t in range(min(nsem, tb)):                    # static, <= nsem iters
        row_copy(t, t).start()

    def step(t, carry):
        slot = t % nsem
        row_copy(t, slot).wait()                      # row t's DMA used this slot

        @pl.when(t + nsem < tb)
        def _():
            row_copy(t + nsem, slot).start()

        return carry

    # Every row DMA is started and waited on by the end of this loop, so the
    # output block is fully written before the pipeline's HBM writeback.
    jax.lax.fori_loop(0, tb, step, 0)


@functools.partial(
    jax.jit,
    static_argnames=("block_tokens", "table_in_vmem", "vmem_budget_bytes"))
def glove_embedding_lookup(ids_flat, emb_table, *, block_tokens=512,
                           table_in_vmem=None,
                           vmem_budget_bytes=24 * 1024 * 1024):
    """ids_flat: int (S,); emb_table: (V, E) float32 -> (S, E) row gather."""
    S = ids_flat.shape[0]
    V, E = emb_table.shape

    # Token block: large (amortize per-step pipeline overhead), multiple of 8
    # (sublane-dense), but <= ~ceil(S/2) so the grid has >= 2 steps for v7x's
    # two TensorCores and tail padding stays small.
    block_tokens = max(8, (block_tokens // 8) * 8)
    half = _round_up(max(-(-max(S, 1) // 2), 1), 8)
    TB = min(block_tokens, half)
    Sp = _round_up(max(S, 1), TB)
    num_blocks = Sp // TB

    ids = ids_flat.astype(jnp.int32)
    if Sp != S:
        ids = jnp.pad(ids, (0, Sp - S))               # padded ids gather row 0
    # TODO(synk): for very long sequences (Sp >> 100K) the ids array should be
    # chunked across several pallas_calls to stay within SMEM.

    itemsize = jnp.dtype(emb_table.dtype).itemsize
    table_bytes = V * E * itemsize
    out_block_bytes = TB * E * itemsize
    if table_in_vmem is None:
        # Budget 2x table (double-buffered constant block) + 2x output block.
        # Larger tables fall through to the HBM DMA-gather path (mandatory for
        # real GloVe vocabularies and for v7x's 64 MiB per-TC VMEM).
        table_in_vmem = (2 * table_bytes + 2 * out_block_bytes
                         <= vmem_budget_bytes)

    if table_in_vmem:
        vmem_need = 2 * table_bytes + 2 * out_block_bytes
        grid_spec = pltpu.PrefetchScalarGridSpec(
            num_scalar_prefetch=1,
            grid=(num_blocks,),
            in_specs=[
                # Whole table, constant index_map -> DMA'd from HBM once and
                # reused across all grid steps.
                pl.BlockSpec((V, E), lambda i, ids_ref: (0, 0)),
            ],
            out_specs=pl.BlockSpec((TB, E), lambda i, ids_ref: (i, 0)),
        )
        kernel = functools.partial(_vmem_gather_kernel, tb=TB)
    else:
        nsem = min(16, TB)
        vmem_need = 2 * out_block_bytes
        grid_spec = pltpu.PrefetchScalarGridSpec(
            num_scalar_prefetch=1,
            grid=(num_blocks,),
            in_specs=[pl.BlockSpec(memory_space=pl.ANY)],  # table stays in HBM
            out_specs=pl.BlockSpec((TB, E), lambda i, ids_ref: (i, 0)),
            scratch_shapes=[pltpu.SemaphoreType.DMA((nsem,))],
        )
        kernel = functools.partial(_hbm_gather_kernel, tb=TB, nsem=nsem)

    out = pl.pallas_call(
        kernel,
        out_shape=jax.ShapeDtypeStruct((Sp, E), emb_table.dtype),
        grid_spec=grid_spec,
        compiler_params=pltpu.CompilerParams(
            dimension_semantics=("parallel",),
            vmem_limit_bytes=int(max(vmem_need + (4 << 20), 16 << 20)),
        ),
    )(ids, emb_table)

    return out[:S] if Sp != S else out


class GloveEmbeddingsPallas:
    """JAX/Pallas equivalent of the PyTorch GloveEmbeddings module."""

    def __init__(self, noTokens, embeddingSize, key):
        self.noTokens = noTokens
        self.embeddingSize = embeddingSize
        # Deterministic synthetic "GloVe" table (stands in for gloveModel.vectors).
        self.weight = jax.random.normal(
            key, (noTokens, embeddingSize), dtype=jnp.float32)

    def __call__(self, input_ids, **lookup_kwargs):
        # Glue (squeeze / reshape) stays in plain JAX; the gather is in Pallas.
        squeezed = jnp.squeeze(input_ids)
        out_prefix_shape = squeezed.shape
        ids_flat = jnp.reshape(squeezed, (-1,)).astype(jnp.int32)
        out_flat = glove_embedding_lookup(ids_flat, self.weight, **lookup_kwargs)
        return jnp.reshape(out_flat, out_prefix_shape + (self.embeddingSize,))


if __name__ == "__main__":
    key = jax.random.PRNGKey(0)
    k_w, k_ids = jax.random.split(key)

    noTokens = 64
    embeddingSize = 128  # gloveWidth (lane-aligned)
    seq = 8

    module = GloveEmbeddingsPallas(noTokens, embeddingSize, k_w)

    # Input shaped (seq, 1) so that .squeeze() is meaningful, as in PyTorch.
    input_ids = jax.random.randint(k_ids, (seq, 1), 0, noTokens, dtype=jnp.int32)

    # Reference (same semantics as nn.Embedding lookup).
    ref = jnp.take(module.weight, jnp.squeeze(input_ids), axis=0)

    # Path 1: VMEM-resident table (auto-selected for this tiny vocab).
    out = module(input_ids)
    out = jax.block_until_ready(out)
    assert out.shape == (seq, embeddingSize), out.shape
    assert jnp.array_equal(out, ref), "mismatch (VMEM-table path)"

    # Path 2: HBM table + per-row DMA gather (used for large vocabularies).
    ids_flat = jnp.reshape(jnp.squeeze(input_ids), (-1,)).astype(jnp.int32)
    out_hbm = glove_embedding_lookup(ids_flat, module.weight, table_in_vmem=False)
    out_hbm = jax.block_until_ready(out_hbm)
    assert jnp.array_equal(out_hbm, ref), "mismatch (HBM DMA-gather path)"

    print("KERNEL_OK")
</pallas_src>

<mosaic_0001>
module attributes {stable_mosaic.version = 11 : i64} {
  func.func @_vmem_gather_kernel(%arg0: i32, %arg1: memref<8xi32, #tpu.memory_space<smem>>, %arg2: memref<64x128xf32, #tpu.memory_space<vmem>>, %arg3: memref<8x128xf32, #tpu.memory_space<vmem>>) attributes {dimension_semantics = [#tpu.dimension_semantics<parallel>], iteration_bounds = array<i64: 1>, scalar_prefetch = 1 : i64, scratch_operands = 0 : i64, tpu.core_type = #tpu.core_type<tc>, window_params = [{pipeline_mode = #tpu.pipeline_mode<synchronous>, transform_indices = @transform_0, window_bounds = array<i64: 64, 128>}, {transform_indices = @transform_1, window_bounds = array<i64: 8, 128>}]} {
    %c8_i32 = arith.constant 8 : i32
    %0 = arith.muli %arg0, %c8_i32 : i32
    %c0_i32 = arith.constant 0 : i32
    %1 = arith.addi %0, %c0_i32 : i32
    %2 = arith.index_cast %1 : i32 to index
    %3 = memref.load %arg1[%2] : memref<8xi32, #tpu.memory_space<smem>>
    %4 = arith.index_cast %3 : i32 to index
    %c0 = arith.constant 0 : index
    %5 = vector.load %arg2[%4, %c0] : memref<64x128xf32, #tpu.memory_space<vmem>>, vector<1x128xf32>
    %6 = arith.index_cast %c0_i32 : i32 to index
    %c0_0 = arith.constant 0 : index
    %7 = vector.load %arg3[%6, %c0_0] : memref<8x128xf32, #tpu.memory_space<vmem>>, vector<1x128xf32>
    tpu.vector_store %arg3[%6, %c0_0], %5 {strides = array<i32>} : memref<8x128xf32, #tpu.memory_space<vmem>>, vector<1x128xf32>,
    %c1_i32 = arith.constant 1 : i32
    %8 = arith.addi %0, %c1_i32 : i32
    %9 = arith.index_cast %8 : i32 to index
    %10 = memref.load %arg1[%9] : memref<8xi32, #tpu.memory_space<smem>>
    %11 = arith.index_cast %10 : i32 to index
    %c0_1 = arith.constant 0 : index
    %12 = vector.load %arg2[%11, %c0_1] : memref<64x128xf32, #tpu.memory_space<vmem>>, vector<1x128xf32>
    %13 = arith.index_cast %c1_i32 : i32 to index
    %c0_2 = arith.constant 0 : index
    %14 = vector.load %arg3[%13, %c0_2] : memref<8x128xf32, #tpu.memory_space<vmem>>, vector<1x128xf32>
    tpu.vector_store %arg3[%13, %c0_2], %12 {strides = array<i32>} : memref<8x128xf32, #tpu.memory_space<vmem>>, vector<1x128xf32>,
    %c2_i32 = arith.constant 2 : i32
    %15 = arith.addi %0, %c2_i32 : i32
    %16 = arith.index_cast %15 : i32 to index
    %17 = memref.load %arg1[%16] : memref<8xi32, #tpu.memory_space<smem>>
    %18 = arith.index_cast %17 : i32 to index
    %c0_3 = arith.constant 0 : index
    %19 = vector.load %arg2[%18, %c0_3] : memref<64x128xf32, #tpu.memory_space<vmem>>, vector<1x128xf32>
    %20 = arith.index_cast %c2_i32 : i32 to index
    %c0_4 = arith.constant 0 : index
    %21 = vector.load %arg3[%20, %c0_4] : memref<8x128xf32, #tpu.memory_space<vmem>>, vector<1x128xf32>
    tpu.vector_store %arg3[%20, %c0_4], %19 {strides = array<i32>} : memref<8x128xf32, #tpu.memory_space<vmem>>, vector<1x128xf32>,
    %c3_i32 = arith.constant 3 : i32
    %22 = arith.addi %0, %c3_i32 : i32
    %23 = arith.index_cast %22 : i32 to index
    %24 = memref.load %arg1[%23] : memref<8xi32, #tpu.memory_space<smem>>
    %25 = arith.index_cast %24 : i32 to index
    %c0_5 = arith.constant 0 : index
    %26 = vector.load %arg2[%25, %c0_5] : memref<64x128xf32, #tpu.memory_space<vmem>>, vector<1x128xf32>
    %27 = arith.index_cast %c3_i32 : i32 to index
    %c0_6 = arith.constant 0 : index
    %28 = vector.load %arg3[%27, %c0_6] : memref<8x128xf32, #tpu.memory_space<vmem>>, vector<1x128xf32>
    tpu.vector_store %arg3[%27, %c0_6], %26 {strides = array<i32>} : memref<8x128xf32, #tpu.memory_space<vmem>>, vector<1x128xf32>,
    %c4_i32 = arith.constant 4 : i32
    %29 = arith.addi %0, %c4_i32 : i32
    %30 = arith.index_cast %29 : i32 to index
    %31 = memref.load %arg1[%30] : memref<8xi32, #tpu.memory_space<smem>>
    %32 = arith.index_cast %31 : i32 to index
    %c0_7 = arith.constant 0 : index
    %33 = vector.load %arg2[%32, %c0_7] : memref<64x128xf32, #tpu.memory_space<vmem>>, vector<1x128xf32>
    %34 = arith.index_cast %c4_i32 : i32 to index
    %c0_8 = arith.constant 0 : index
    %35 = vector.load %arg3[%34, %c0_8] : memref<8x128xf32, #tpu.memory_space<vmem>>, vector<1x128xf32>
    tpu.vector_store %arg3[%34, %c0_8], %33 {strides = array<i32>} : memref<8x128xf32, #tpu.memory_space<vmem>>, vector<1x128xf32>,
    %c5_i32 = arith.constant 5 : i32
    %36 = arith.addi %0, %c5_i32 : i32
    %37 = arith.index_cast %36 : i32 to index
    %38 = memref.load %arg1[%37] : memref<8xi32, #tpu.memory_space<smem>>
    %39 = arith.index_cast %38 : i32 to index
    %c0_9 = arith.constant 0 : index
    %40 = vector.load %arg2[%39, %c0_9] : memref<64x128xf32, #tpu.memory_space<vmem>>, vector<1x128xf32>
    %41 = arith.index_cast %c5_i32 : i32 to index
    %c0_10 = arith.constant 0 : index
    %42 = vector.load %arg3[%41, %c0_10] : memref<8x128xf32, #tpu.memory_space<vmem>>, vector<1x128xf32>
    tpu.vector_store %arg3[%41, %c0_10], %40 {strides = array<i32>} : memref<8x128xf32, #tpu.memory_space<vmem>>, vector<1x128xf32>,
    %c6_i32 = arith.constant 6 : i32
    %43 = arith.addi %0, %c6_i32 : i32
    %44 = arith.index_cast %43 : i32 to index
    %45 = memref.load %arg1[%44] : memref<8xi32, #tpu.memory_space<smem>>
    %46 = arith.index_cast %45 : i32 to index
    %c0_11 = arith.constant 0 : index
    %47 = vector.load %arg2[%46, %c0_11] : memref<64x128xf32, #tpu.memory_space<vmem>>, vector<1x128xf32>
    %48 = arith.index_cast %c6_i32 : i32 to index
    %c0_12 = arith.constant 0 : index
    %49 = vector.load %arg3[%48, %c0_12] : memref<8x128xf32, #tpu.memory_space<vmem>>, vector<1x128xf32>
    tpu.vector_store %arg3[%48, %c0_12], %47 {strides = array<i32>} : memref<8x128xf32, #tpu.memory_space<vmem>>, vector<1x128xf32>,
    %c7_i32 = arith.constant 7 : i32
    %50 = arith.addi %0, %c7_i32 : i32
    %51 = arith.index_cast %50 : i32 to index
    %52 = memref.load %arg1[%51] : memref<8xi32, #tpu.memory_space<smem>>
    %53 = arith.index_cast %52 : i32 to index
    %c0_13 = arith.constant 0 : index
    %54 = vector.load %arg2[%53, %c0_13] : memref<64x128xf32, #tpu.memory_space<vmem>>, vector<1x128xf32>
    %55 = arith.index_cast %c7_i32 : i32 to index
    %c0_14 = arith.constant 0 : index
    %56 = vector.load %arg3[%55, %c0_14] : memref<8x128xf32, #tpu.memory_space<vmem>>, vector<1x128xf32>
    tpu.vector_store %arg3[%55, %c0_14], %54 {strides = array<i32>} : memref<8x128xf32, #tpu.memory_space<vmem>>, vector<1x128xf32>,
    %c8_i32_15 = arith.constant 8 : i32
    return
  }
  func.func @transform_0(%arg0: i32, %arg1: memref<8xi32, #tpu.memory_space<smem>>) -> (i32, i32) {
    %c0_i32 = arith.constant 0 : i32
    %c0_i32_0 = arith.constant 0 : i32
    %c0_i32_1 = arith.constant 0 : i32
    return %c0_i32, %c0_i32_0 : i32, i32
  }
  func.func @transform_1(%arg0: i32, %arg1: memref<8xi32, #tpu.memory_space<smem>>) -> (i32, i32) {
    %c0_i32 = arith.constant 0 : i32
    %c0_i32_0 = arith.constant 0 : i32
    return %arg0, %c0_i32 : i32, i32
  }
}

</mosaic_0001>

<llo_original>
// kernel: glove_embedding_lookup.1
$region0: #{glove_embedding_lookup.1}
  #allocation0 [shape = 'u32[]', space=smem, size = 0x4, offset = 0x4, fixed_abs, tag = 'smem constant byte address 0x4 - core index']
  #allocation1 [shape = 'u32[72,128]{1,0:T(1,128)}', space=vmem, size = 0x9000, scoped, tag = 'internal scratch']
  #allocation2 [shape = 's32[1]{0}', space=sflag, size = 0x4, scoped, tag = 'scoped memory for glove_embedding_lookup.1']
  #allocation3 [shape = 'u8[512]{0}', space=smem, size = 0x200, scoped, tag = 'prefetched SMEM operand 0']
  %s0 = inlined_call_operand.hbm [shape: s32[8], index: 0, kind: input, shape index: {}]
  %s1 = inlined_call_operand.hbm [shape: f32[64,128], index: 1, kind: input, shape index: {}]
  %s2 = inlined_call_operand.hbm [shape: f32[8,128], index: 2, kind: output, shape index: {}]
  %s3 = sld [smem:[#allocation0]]
  $region18: #{glove_embedding_lookup.1} parent=0
    _
  %s5 = ssub.s32 1, %s3
  %s6 = scalar_select 0, %s5, %s3
  %s8 = sshll.u32 %s0, 4
  %s9 = int_to_ptr.hbm [resolvable:$true] %s8
  %11 = dma.hbm_to_smem %s9, 16, [#allocation3], [#allocation2]
  %13 = dma.done [#allocation2], 16
  %14 = sfence
  $region1: #{glove_embedding_lookup.1} parent=0
    #allocation4 [shape = 'u8[32768]{0}', space=vmem, size = 0x8000, scoped, tag = 'input window, operand 1, single buffered']
    #allocation5 [shape = 's32[1]{0}', space=sflag, size = 0x4, scoped, tag = 'scoped memory for glove_embedding_lookup.1']
    #allocation6 [shape = 's32[1]{0}', space=sflag, size = 0x4, scoped, tag = 'scoped memory for glove_embedding_lookup.1']
    #allocation7 [shape = 'u8[4096]{0}', space=vmem, size = 0x1000, scoped, tag = 'output window, operand 0, single buffered']
    %15 = vsyncpa [#allocation5], 0
    %16 = vsyncpa [#allocation6], 0
    // Predicated region
    $region2: #{glove_embedding_lookup.1} parent=1 // pred_check
      _
    $region3: #{glove_embedding_lookup.1} parent=1 // pred_check_branch
      %18 = sbr.rel (0) target = $region5
    $region4: #{glove_embedding_lookup.1} parent=1 // pred_region
      %20 = vsyncadd [#allocation5], 0
      %s21 = sshll.u32 %s1, 4
      %s22 = int_to_ptr.hbm [resolvable:$true] %s21
      %s23 = sshll.u32 [#allocation4], 4
      %s24 = int_to_ptr.vmem [resolvable:$true] %s23
      %29 = dma.hbm_to_vmem [thread:$0]  %s22, 1024, %s24, [#allocation5], 128, 128, 8
    $region5: #{glove_embedding_lookup.1} parent=1 // pred_fallthru
      _
    // Predicated region
    $region6: #{glove_embedding_lookup.1} parent=1 // pred_check
      _
    $region7: #{glove_embedding_lookup.1} parent=1 // pred_check_branch
      %31 = sbr.rel (0) target = $region9
    $region8: #{glove_embedding_lookup.1} parent=1 // pred_region
      %33 = dma.done [#allocation5], 1024
    $region9: #{glove_embedding_lookup.1} parent=1 // pred_fallthru
      _
    %s34 = smul.u32 0, 8
    %s35 = sld [smem:[#allocation3 + %s34]]
    %s36 = scalar_lea.vmem [#allocation4], %s35
    %v37 = vld [vmem:[%s36] sm:$0x1]
    %38 = vst [vmem:[#allocation7] sm:$0x1] %v37
    %s39 = sadd.s32 %s34, 1
    %s40 = sld [smem:[#allocation3 + %s39]]
    %s41 = scalar_lea.vmem [#allocation4], %s40
    %v42 = vld [vmem:[%s41] sm:$0x1]
    %43 = vst [vmem:[#allocation7 + $0x1] sm:$0x1] %v42
    %s44 = sadd.s32 %s34, 2
    %s45 = sld [smem:[#allocation3 + %s44]]
    %s46 = scalar_lea.vmem [#allocation4], %s45
    %v47 = vld [vmem:[%s46] sm:$0x1]
    %48 = vst [vmem:[#allocation7 + $0x2] sm:$0x1] %v47
    %s49 = sadd.s32 %s34, 3
    %s50 = sld [smem:[#allocation3 + %s49]]
    %s51 = scalar_lea.vmem [#allocation4], %s50
    %v52 = vld [vmem:[%s51] sm:$0x1]
    %53 = vst [vmem:[#allocation7 + $0x3] sm:$0x1] %v52
    %s54 = sadd.s32 %s34, 4
    %s55 = sld [smem:[#allocation3 + %s54]]
    %s56 = scalar_lea.vmem [#allocation4], %s55
    %v57 = vld [vmem:[%s56] sm:$0x1]
    %58 = vst [vmem:[#allocation7 + $0x4] sm:$0x1] %v57
    %s59 = sadd.s32 %s34, 5
    %s60 = sld [smem:[#allocation3 + %s59]]
    %s61 = scalar_lea.vmem [#allocation4], %s60
    %v62 = vld [vmem:[%s61] sm:$0x1]
    %63 = vst [vmem:[#allocation7 + $0x5] sm:$0x1] %v62
    %s64 = sadd.s32 %s34, 6
    %s65 = sld [smem:[#allocation3 + %s64]]
    %s66 = scalar_lea.vmem [#allocation4], %s65
    %v67 = vld [vmem:[%s66] sm:$0x1]
    %68 = vst [vmem:[#allocation7 + $0x6] sm:$0x1] %v67
    %s69 = sadd.s32 %s34, 7
    %s70 = sld [smem:[#allocation3 + %s69]]
    %s71 = scalar_lea.vmem [#allocation4], %s70
    %v72 = vld [vmem:[%s71] sm:$0x1]
    %73 = vst [vmem:[#allocation7 + $0x7] sm:$0x1] %v72
    // Predicated region
    $region10: #{glove_embedding_lookup.1} parent=1 // pred_check
      _
    $region11: #{glove_embedding_lookup.1} parent=1 // pred_check_branch
      %75 = sbr.rel (0) target = $region13
    $region12: #{glove_embedding_lookup.1} parent=1 // pred_region
      %77 = vsyncadd [#allocation6], 0
      %s79 = sshll.u32 [#allocation7], 4
      %s80 = int_to_ptr.vmem [resolvable:$true] %s79
      %s81 = sshll.u32 %s2, 4
      %s82 = int_to_ptr.hbm [resolvable:$true] %s81
      %84 = dma.vmem_to_hbm [thread:$0]  %s80, 128, %s82, [#allocation6]
    $region13: #{glove_embedding_lookup.1} parent=1 // pred_fallthru
      _
    // Predicated region
    $region14: #{glove_embedding_lookup.1} parent=1 // pred_check
      _
    $region15: #{glove_embedding_lookup.1} parent=1 // pred_check_branch
      %86 = sbr.rel (0) target = $region17
    $region16: #{glove_embedding_lookup.1} parent=1 // pred_region
      %88 = dma.done [#allocation6], 128
    $region17: #{glove_embedding_lookup.1} parent=1 // pred_fallthru
      _
    %89 = vsyncpa [#allocation5], 1
    %90 = vsyncpa [#allocation6], 1

</llo_original>
